<compile_context>
chip_gen: v6e
topology: v6e:2x2x1
jax: 0.10.0
libtpu: 0.0.40
codegen_flags: <defaults>
</compile_context>

<pallas_src>
import jax
import jax.numpy as jnp
from jax.experimental import pallas as pl
from jax.experimental.pallas import tpu as pltpu

LANE = 128     # vreg lane width
SUBLANE = 8    # f32 sublane height


def _round_up(n, m):
    return ((n + m - 1) // m) * m


def mlp_kernel(x_ref, w1_ref, b1_ref, w2_ref, b2_ref, o_ref):
    # x_ref:  (TB, D)      lane-thin input tile (D == full last dim, e.g. 10)
    # w1_ref: (D, H_pad)   b1_ref: (1, H_pad)
    # w2_ref: (H_pad, D)   b2_ref: (1, D)
    # o_ref:  (TB, D)      lane-thin output tile
    h = jnp.dot(x_ref[...], w1_ref[...], preferred_element_type=jnp.float32)
    h = jnp.maximum(h + b1_ref[...], 0.0)          # fc1 bias + ReLU, f32
    y = jnp.dot(h, w2_ref[...], preferred_element_type=jnp.float32)
    o_ref[...] = (y + b2_ref[...]).astype(o_ref.dtype)


def prepare_params(w1, b1, w2, b2):
    """One-time parameter prep (hoisted out of the per-forward path).

    w1: (H, D) PyTorch layout, b1: (H,), w2: (D, H) PyTorch layout, b2: (D,).
    Only the hidden dim is padded (H -> H_pad, multiple of 128); the logits
    dim D stays unpadded so x / out remain lane-thin in HBM.
    Returns w1p (D, H_pad), b1p (1, H_pad), w2p (H_pad, D), b2p (1, D).
    """
    H, D = w1.shape
    H_pad = _round_up(H, LANE)
    w1p = jnp.zeros((D, H_pad), jnp.float32).at[:, :H].set(w1.T)
    b1p = jnp.zeros((1, H_pad), jnp.float32).at[:, :H].set(b1)
    w2p = jnp.zeros((H_pad, D), jnp.float32).at[:H, :].set(w2.T)
    b2p = b2.reshape(1, D).astype(jnp.float32)
    return w1p, b1p, w2p, b2p


@jax.jit
def mlp_scalar_forward(x, w1p, b1p, w2p, b2p):
    """x: (B, D) logits; padded params from prepare_params. Returns (B, D)."""
    B, D = x.shape
    _, H_pad = w1p.shape

    # Batch tile: whole (8-row aligned) batch when small, 2048 rows when
    # large.  Thin (TB, D) I/O tiles + the (TB, H_pad) f32 hidden temp stay
    # a few MiB even at TB=2048 -> safe on every generation's scoped VMEM.
    TB = min(2048, _round_up(B, SUBLANE))
    grid = (pl.cdiv(B, TB),)   # partial edge block allowed (masked writes)

    itemsize = jnp.dtype(x.dtype).itemsize
    bytes_accessed = (
        2 * B * D * itemsize                                       # x + out
        + (w1p.size + b1p.size + w2p.size + b2p.size) * 4          # params
    )

    out = pl.pallas_call(
        mlp_kernel,
        out_shape=jax.ShapeDtypeStruct((B, D), x.dtype),
        grid=grid,
        in_specs=[
            # x: lane-thin, tiled over the batch grid axis.
            pl.BlockSpec((TB, D), lambda i: (i, 0)),
            # Weights / biases: constant block index -> fetched once and kept
            # VMEM-resident across all batch tiles.
            pl.BlockSpec((D, H_pad), lambda i: (0, 0)),
            pl.BlockSpec((1, H_pad), lambda i: (0, 0)),
            pl.BlockSpec((H_pad, D), lambda i: (0, 0)),
            pl.BlockSpec((1, D), lambda i: (0, 0)),
        ],
        out_specs=pl.BlockSpec((TB, D), lambda i: (i, 0)),
        compiler_params=pltpu.CompilerParams(
            dimension_semantics=("parallel",),
            vmem_limit_bytes=32 * 1024 * 1024,
        ),
        cost_estimate=pl.CostEstimate(
            flops=2 * B * (D * H_pad + H_pad * D),
            transcendentals=0,
            bytes_accessed=bytes_accessed,
        ),
    )(x, w1p, b1p, w2p, b2p)

    return out


def mlp_scalar_reference(x, w1, b1, w2, b2):
    h = jnp.maximum(x @ w1.T + b1, 0.0)
    return h @ w2.T + b2


if __name__ == "__main__":
    logits_dims = 10
    hidden_neurons = 100

    key = jax.random.PRNGKey(0)
    k_x, k_x2, k_w1, k_b1, k_w2, k_b2 = jax.random.split(key, 6)

    # Deterministic parameter init (uniform, PyTorch-Linear-style bounds).
    bound1 = 1.0 / (logits_dims ** 0.5)
    bound2 = 1.0 / (hidden_neurons ** 0.5)
    w1 = jax.random.uniform(k_w1, (hidden_neurons, logits_dims),
                            jnp.float32, -bound1, bound1)
    b1 = jax.random.uniform(k_b1, (hidden_neurons,), jnp.float32, -bound1, bound1)
    w2 = jax.random.uniform(k_w2, (logits_dims, hidden_neurons),
                            jnp.float32, -bound2, bound2)
    b2 = jax.random.uniform(k_b2, (logits_dims,), jnp.float32, -bound2, bound2)

    # One-time parameter prep (transpose + hidden-dim padding).
    w1p, b1p, w2p, b2p = prepare_params(w1, b1, w2, b2)

    # Case 1: sublane-aligned small batch.
    x = jax.random.normal(k_x, (8, logits_dims), jnp.float32)
    out = jax.block_until_ready(mlp_scalar_forward(x, w1p, b1p, w2p, b2p))
    ref = mlp_scalar_reference(x, w1, b1, w2, b2)
    assert out.shape == (8, logits_dims)
    assert jnp.allclose(out, ref, atol=1e-5, rtol=1e-5), "mismatch (B=8)"

    # Case 2: batch not a multiple of the sublane -> partial edge block.
    x2 = jax.random.normal(k_x2, (20, logits_dims), jnp.float32)
    out2 = jax.block_until_ready(mlp_scalar_forward(x2, w1p, b1p, w2p, b2p))
    ref2 = mlp_scalar_reference(x2, w1, b1, w2, b2)
    assert out2.shape == (20, logits_dims)
    assert jnp.allclose(out2, ref2, atol=1e-5, rtol=1e-5), "mismatch (B=20)"

    print("KERNEL_OK")
</pallas_src>

<mosaic_0001>
module attributes {stable_mosaic.version = 11 : i64} {
  func.func @mlp_kernel(%arg0: i32, %arg1: memref<8x10xf32, #tpu.memory_space<vmem>>, %arg2: memref<10x128xf32, #tpu.memory_space<vmem>>, %arg3: memref<1x128xf32, #tpu.memory_space<vmem>>, %arg4: memref<128x10xf32, #tpu.memory_space<vmem>>, %arg5: memref<1x10xf32, #tpu.memory_space<vmem>>, %arg6: memref<8x10xf32, #tpu.memory_space<vmem>>) attributes {dimension_semantics = [#tpu.dimension_semantics<parallel>], iteration_bounds = array<i64: 1>, scalar_prefetch = 0 : i64, scratch_operands = 0 : i64, tpu.core_type = #tpu.core_type<tc>, window_params = [{transform_indices = @transform_0, window_bounds = array<i64: 8, 10>}, {pipeline_mode = #tpu.pipeline_mode<synchronous>, transform_indices = @transform_1, window_bounds = array<i64: 10, 128>}, {pipeline_mode = #tpu.pipeline_mode<synchronous>, transform_indices = @transform_2, window_bounds = array<i64: 1, 128>}, {pipeline_mode = #tpu.pipeline_mode<synchronous>, transform_indices = @transform_3, window_bounds = array<i64: 128, 10>}, {pipeline_mode = #tpu.pipeline_mode<synchronous>, transform_indices = @transform_4, window_bounds = array<i64: 1, 10>}, {transform_indices = @transform_5, window_bounds = array<i64: 8, 10>}]} {
    %c0 = arith.constant 0 : index
    %c0_0 = arith.constant 0 : index
    %0 = vector.load %arg1[%c0, %c0_0] : memref<8x10xf32, #tpu.memory_space<vmem>>, vector<8x10xf32>
    %c0_1 = arith.constant 0 : index
    %c0_2 = arith.constant 0 : index
    %1 = vector.load %arg2[%c0_1, %c0_2] : memref<10x128xf32, #tpu.memory_space<vmem>>, vector<10x128xf32>
    %cst = arith.constant dense<0.000000e+00> : vector<8x128xf32>
    %2 = tpu.matmul %0, %1, %cst {dimension_numbers = #tpu.dot_dimension_numbers<[1], [0], [0], [1], [0, 0, 1, 1], [], []>} : vector<8x10xf32>, vector<10x128xf32>, vector<8x128xf32> -> vector<8x128xf32>
    %c0_3 = arith.constant 0 : index
    %c0_4 = arith.constant 0 : index
    %3 = vector.load %arg3[%c0_3, %c0_4] : memref<1x128xf32, #tpu.memory_space<vmem>>, vector<1x128xf32>
    %4 = vector.broadcast %3 : vector<1x128xf32> to vector<8x128xf32>
    %5 = arith.addf %2, %4 : vector<8x128xf32>
    %cst_5 = arith.constant 0.000000e+00 : f32
    %6 = vector.broadcast %cst_5 : f32 to vector<8x128xf32>
    %7 = arith.maximumf %5, %6 : vector<8x128xf32>
    %c0_6 = arith.constant 0 : index
    %c0_7 = arith.constant 0 : index
    %8 = vector.load %arg4[%c0_6, %c0_7] : memref<128x10xf32, #tpu.memory_space<vmem>>, vector<128x10xf32>
    %cst_8 = arith.constant dense<0.000000e+00> : vector<8x10xf32>
    %9 = tpu.matmul %7, %8, %cst_8 {dimension_numbers = #tpu.dot_dimension_numbers<[1], [0], [0], [1], [0, 0, 1, 1], [], []>} : vector<8x128xf32>, vector<128x10xf32>, vector<8x10xf32> -> vector<8x10xf32>
    %c0_9 = arith.constant 0 : index
    %c0_10 = arith.constant 0 : index
    %10 = vector.load %arg5[%c0_9, %c0_10] : memref<1x10xf32, #tpu.memory_space<vmem>>, vector<1x10xf32>
    %11 = vector.broadcast %10 : vector<1x10xf32> to vector<8x10xf32>
    %12 = arith.addf %9, %11 : vector<8x10xf32>
    %c0_11 = arith.constant 0 : index
    %c0_12 = arith.constant 0 : index
    %13 = vector.load %arg6[%c0_11, %c0_12] : memref<8x10xf32, #tpu.memory_space<vmem>>, vector<8x10xf32>
    tpu.vector_store %arg6[%c0_11, %c0_12], %12 {strides = array<i32>} : memref<8x10xf32, #tpu.memory_space<vmem>>, vector<8x10xf32>,
    return
  }
  func.func @transform_0(%arg0: i32) -> (i32, i32) {
    %c0_i32 = arith.constant 0 : i32
    %c0_i32_0 = arith.constant 0 : i32
    return %arg0, %c0_i32 : i32, i32
  }
  func.func @transform_1(%arg0: i32) -> (i32, i32) {
    %c0_i32 = arith.constant 0 : i32
    %c0_i32_0 = arith.constant 0 : i32
    %c0_i32_1 = arith.constant 0 : i32
    return %c0_i32, %c0_i32_0 : i32, i32
  }
  func.func @transform_2(%arg0: i32) -> (i32, i32) {
    %c0_i32 = arith.constant 0 : i32
    %c0_i32_0 = arith.constant 0 : i32
    %c0_i32_1 = arith.constant 0 : i32
    return %c0_i32, %c0_i32_0 : i32, i32
  }
  func.func @transform_3(%arg0: i32) -> (i32, i32) {
    %c0_i32 = arith.constant 0 : i32
    %c0_i32_0 = arith.constant 0 : i32
    %c0_i32_1 = arith.constant 0 : i32
    return %c0_i32, %c0_i32_0 : i32, i32
  }
  func.func @transform_4(%arg0: i32) -> (i32, i32) {
    %c0_i32 = arith.constant 0 : i32
    %c0_i32_0 = arith.constant 0 : i32
    %c0_i32_1 = arith.constant 0 : i32
    return %c0_i32, %c0_i32_0 : i32, i32
  }
  func.func @transform_5(%arg0: i32) -> (i32, i32) {
    %c0_i32 = arith.constant 0 : i32
    %c0_i32_0 = arith.constant 0 : i32
    return %arg0, %c0_i32 : i32, i32
  }
}

</mosaic_0001>

<llo_original>
// kernel: mlp_scalar_forward.1
$region0: #{mlp_scalar_forward.1}
  #allocation0 [shape = 'u32[]', space=smem, size = 0x4, offset = 0x4, fixed_abs, tag = 'smem constant byte address 0x4 - core index']
  #allocation1 [shape = 'u32[144,128]{1,0:T(1,128)}', space=vmem, size = 0x12000, scoped, tag = 'internal scratch']
  %s0 = inlined_call_operand.vmem [shape: f32[8,10], index: 0, kind: input, shape index: {}]
  %s1 = inlined_call_operand.vmem [shape: f32[10,128], index: 1, kind: input, shape index: {}]
  %s2 = inlined_call_operand.vmem [shape: f32[1,128], index: 2, kind: input, shape index: {}]
  %s3 = inlined_call_operand.vmem [shape: f32[128,10], index: 3, kind: input, shape index: {}]
  %s4 = inlined_call_operand.vmem [shape: f32[1,10], index: 4, kind: input, shape index: {}]
  %s5 = inlined_call_operand.hbm [shape: f32[8,10], index: 5, kind: output, shape index: {}]
  %s6 = sld [smem:[#allocation0]]
  $region30: #{mlp_scalar_forward.1} parent=0
    _
  %s8 = ssub.s32 1, %s6
  %s9 = scalar_select 0, %s8, %s6
  $region1: #{mlp_scalar_forward.1} parent=0
    #allocation2 [shape = 'u8[4096]{0}', space=vmem, size = 0x1000, scoped, tag = 'output window, operand 0, single buffered']
    #allocation3 [shape = 's32[1]{0}', space=sflag, size = 0x4, scoped, tag = 'scoped memory for mlp_scalar_forward.1']
    %10 = vsyncpa [#allocation3], 0
    // Predicated region
    $region2: #{mlp_scalar_forward.1} parent=1 // pred_check
      _
    $region3: #{mlp_scalar_forward.1} parent=1 // pred_check_branch
      %12 = sbr.rel (0) target = $region5
    $region4: #{mlp_scalar_forward.1} parent=1 // pred_region
      _
    $region5: #{mlp_scalar_forward.1} parent=1 // pred_fallthru
      _
    // Predicated region
    $region6: #{mlp_scalar_forward.1} parent=1 // pred_check
      _
    $region7: #{mlp_scalar_forward.1} parent=1 // pred_check_branch
      %14 = sbr.rel (0) target = $region9
    $region8: #{mlp_scalar_forward.1} parent=1 // pred_region
      _
    $region9: #{mlp_scalar_forward.1} parent=1 // pred_fallthru
      _
    // Predicated region
    $region10: #{mlp_scalar_forward.1} parent=1 // pred_check
      _
    $region11: #{mlp_scalar_forward.1} parent=1 // pred_check_branch
      %16 = sbr.rel (0) target = $region13
    $region12: #{mlp_scalar_forward.1} parent=1 // pred_region
      _
    $region13: #{mlp_scalar_forward.1} parent=1 // pred_fallthru
      _
    // Predicated region
    $region14: #{mlp_scalar_forward.1} parent=1 // pred_check
      _
    $region15: #{mlp_scalar_forward.1} parent=1 // pred_check_branch
      %18 = sbr.rel (0) target = $region17
    $region16: #{mlp_scalar_forward.1} parent=1 // pred_region
      _
    $region17: #{mlp_scalar_forward.1} parent=1 // pred_fallthru
      _
    // Predicated region
    $region18: #{mlp_scalar_forward.1} parent=1 // pred_check
      _
    $region19: #{mlp_scalar_forward.1} parent=1 // pred_check_branch
      %20 = sbr.rel (0) target = $region21
    $region20: #{mlp_scalar_forward.1} parent=1 // pred_region
      _
    $region21: #{mlp_scalar_forward.1} parent=1 // pred_fallthru
      _
    %v21 = vld [vmem:[%s0] sm:$0xff]
    %v22 = vld [vmem:[%s1] sm:$0xff]
    %v23 = vld [vmem:[%s1 + $0x8] sm:$0x3]
    %v24 = vld [vmem:[%s2] sm:$0x1]
    %v26 = vlaneseq
    %v27 = vshrl.u32 %v26, 7
    %v28 = vsub.s32 0, %v27
    %v29 = vrot.slane %v24, %v28
    %vm31 = vcmask 80896
    %v33 = vsel %vm31, %v21, 0
    %vm35 = vcmask 1041408
    %v37 = vsel %vm35, %v23, 0
    %39 = vmatprep.subr.mxu0 0.0
    %40 = vmatpush1.msra.mxu0 0.0
    %41 = vmatprep.subr.mxu0 0.0
    %42 = vmatpush1.msra.mxu0 0.0
    %43 = vmatprep.subr.mxu0 0.0
    %44 = vmatpush1.msra.mxu0 0.0
    %45 = vmatprep.subr.mxu0 0.0
    %46 = vmatpush1.msra.mxu0 0.0
    %47 = vmatprep.subr.mxu0 0.0
    %48 = vmatpush1.msra.mxu0 0.0
    %49 = vmatprep.subr.mxu0 0.0
    %50 = vmatpush1.msra.mxu0 0.0
    %51 = vmatprep.subr.mxu0 0.0
    %52 = vmatpush1.msra.mxu0 0.0
    %53 = vmatprep.subr.mxu0 0.0
    %54 = vmatpush1.msra.mxu0 0.0
    %55 = vmatprep.subr.mxu0 0.0
    %56 = vmatpush1.msra.mxu0 0.0
    %57 = vmatprep.subr.mxu0 0.0
    %58 = vmatpush1.msra.mxu0 0.0
    %59 = vmatprep.subr.mxu0 0.0
    %60 = vmatpush1.msra.mxu0 0.0
    %61 = vmatprep.subr.mxu0 0.0
    %62 = vmatpush1.msra.mxu0 0.0
    %63 = vmatprep.subr.mxu0 0.0
    %64 = vmatpush1.msra.mxu0 0.0
    %65 = vmatprep.subr.mxu0 0.0
    %66 = vmatpush1.msra.mxu0 0.0
    %67 = vmatprep.subr.mxu0 0.0
    %68 = vmatpush1.msra.mxu0 %v37
    %69 = vmatprep.subr.mxu0 0.0
    %70 = vmatpush1.msra.mxu0 %v22
    %71 = vmatprep.subr.mxu0 0.0
    %72 = vmatpush2.msra.mxu0 0.0
    %73 = vmatprep.subr.mxu0 0.0
    %74 = vmatpush2.msra.mxu0 0.0
    %75 = vmatprep.subr.mxu0 0.0
    %76 = vmatpush2.msra.mxu0 0.0
    %77 = vmatprep.subr.mxu0 0.0
    %78 = vmatpush2.msra.mxu0 0.0
    %79 = vmatprep.subr.mxu0 0.0
    %80 = vmatpush2.msra.mxu0 0.0
    %81 = vmatprep.subr.mxu0 0.0
    %82 = vmatpush2.msra.mxu0 0.0
    %83 = vmatprep.subr.mxu0 0.0
    %84 = vmatpush2.msra.mxu0 0.0
    %85 = vmatprep.subr.mxu0 0.0
    %86 = vmatpush2.msra.mxu0 0.0
    %87 = vmatprep.subr.mxu0 0.0
    %88 = vmatpush2.msra.mxu0 0.0
    %89 = vmatprep.subr.mxu0 0.0
    %90 = vmatpush2.msra.mxu0 0.0
    %91 = vmatprep.subr.mxu0 0.0
    %92 = vmatpush2.msra.mxu0 0.0
    %93 = vmatprep.subr.mxu0 0.0
    %94 = vmatpush2.msra.mxu0 0.0
    %95 = vmatprep.subr.mxu0 0.0
    %96 = vmatpush2.msra.mxu0 0.0
    %97 = vmatprep.subr.mxu0 0.0
    %98 = vmatpush2.msra.mxu0 0.0
    %99 = vmatprep.subr.mxu0 0.0
    %100 = vmatpush2.msra.mxu0 0.0
    %101 = vmatprep.subr.mxu0 0.0
    %102 = vmatpush2.msra.mxu0 0.0
    %103 = vmatprep.mubr.f32.mxu0 0.0
    %104 = vmatmul.mubr.f32.gmra.mxu0 %v33
    %v105 = vpop.f32.mrf.mxu0
    %v106 = vadd.f32 %v29, %v105
    %v107 = vpop.f32.mrf.mxu0
    %108 = vdwg.mxu0
    %v109 = vmax.f32 %v106, 0.0
    %v110 = vld [vmem:[%s3] sm:$0xff]
    %v111 = vld [vmem:[%s3 + $0x8] sm:$0xff]
    %v112 = vld [vmem:[%s3 + $0x10] sm:$0xff]
    %v113 = vld [vmem:[%s3 + $0x18] sm:$0xff]
    %v114 = vld [vmem:[%s3 + $0x20] sm:$0xff]
    %v115 = vld [vmem:[%s3 + $0x28] sm:$0xff]
    %v116 = vld [vmem:[%s3 + $0x30] sm:$0xff]
    %v117 = vld [vmem:[%s3 + $0x38] sm:$0xff]
    %v118 = vld [vmem:[%s3 + $0x40] sm:$0xff]
    %v119 = vld [vmem:[%s3 + $0x48] sm:$0xff]
    %v120 = vld [vmem:[%s3 + $0x50] sm:$0xff]
    %v121 = vld [vmem:[%s3 + $0x58] sm:$0xff]
    %v122 = vld [vmem:[%s3 + $0x60] sm:$0xff]
    %v123 = vld [vmem:[%s3 + $0x68] sm:$0xff]
    %v124 = vld [vmem:[%s3 + $0x70] sm:$0xff]
    %v125 = vld [vmem:[%s3 + $0x78] sm:$0xff]
    %v126 = vld [vmem:[%s4] sm:$0x1]
    %v128 = vlaneseq
    %v129 = vshrl.u32 %v128, 7
    %v130 = vsub.s32 0, %v129
    %v131 = vrot.slane %v126, %v130
    %133 = vmatprep.subr.mxu0 0.0
    %134 = vmatpush1.msra.mxu0 %v125
    %135 = vmatprep.subr.mxu0 0.0
    %136 = vmatpush1.msra.mxu0 %v124
    %137 = vmatprep.subr.mxu0 0.0
    %138 = vmatpush1.msra.mxu0 %v123
    %139 = vmatprep.subr.mxu0 0.0
    %140 = vmatpush1.msra.mxu0 %v122
    %141 = vmatprep.subr.mxu0 0.0
    %142 = vmatpush1.msra.mxu0 %v121
    %143 = vmatprep.subr.mxu0 0.0
    %144 = vmatpush1.msra.mxu0 %v120
    %145 = vmatprep.subr.mxu0 0.0
    %146 = vmatpush1.msra.mxu0 %v119
    %147 = vmatprep.subr.mxu0 0.0
    %148 = vmatpush1.msra.mxu0 %v118
    %149 = vmatprep.subr.mxu0 0.0
    %150 = vmatpush1.msra.mxu0 %v117
    %151 = vmatprep.subr.mxu0 0.0
    %152 = vmatpush1.msra.mxu0 %v116
    %153 = vmatprep.subr.mxu0 0.0
    %154 = vmatpush1.msra.mxu0 %v115
    %155 = vmatprep.subr.mxu0 0.0
    %156 = vmatpush1.msra.mxu0 %v114
    %157 = vmatprep.subr.mxu0 0.0
    %158 = vmatpush1.msra.mxu0 %v113
    %159 = vmatprep.subr.mxu0 0.0
    %160 = vmatpush1.msra.mxu0 %v112
    %161 = vmatprep.subr.mxu0 0.0
    %162 = vmatpush1.msra.mxu0 %v111
    %163 = vmatprep.subr.mxu0 0.0
    %164 = vmatpush1.msra.mxu0 %v110
    %165 = vmatprep.subr.mxu0 0.0
    %166 = vmatpush2.msra.mxu0 0.0
    %167 = vmatprep.subr.mxu0 0.0
    %168 = vmatpush2.msra.mxu0 0.0
    %169 = vmatprep.subr.mxu0 0.0
    %170 = vmatpush2.msra.mxu0 0.0
    %171 = vmatprep.subr.mxu0 0.0
    %172 = vmatpush2.msra.mxu0 0.0
    %173 = vmatprep.subr.mxu0 0.0
    %174 = vmatpush2.msra.mxu0 0.0
    %175 = vmatprep.subr.mxu0 0.0
    %176 = vmatpush2.msra.mxu0 0.0
    %177 = vmatprep.subr.mxu0 0.0
    %178 = vmatpush2.msra.mxu0 0.0
    %179 = vmatprep.subr.mxu0 0.0
    %180 = vmatpush2.msra.mxu0 0.0
    %181 = vmatprep.subr.mxu0 0.0
    %182 = vmatpush2.msra.mxu0 0.0
    %183 = vmatprep.subr.mxu0 0.0
    %184 = vmatpush2.msra.mxu0 0.0
    %185 = vmatprep.subr.mxu0 0.0
    %186 = vmatpush2.msra.mxu0 0.0
    %187 = vmatprep.subr.mxu0 0.0
    %188 = vmatpush2.msra.mxu0 0.0
    %189 = vmatprep.subr.mxu0 0.0
    %190 = vmatpush2.msra.mxu0 0.0
    %191 = vmatprep.subr.mxu0 0.0
    %192 = vmatpush2.msra.mxu0 0.0
    %193 = vmatprep.subr.mxu0 0.0
    %194 = vmatpush2.msra.mxu0 0.0
    %195 = vmatprep.subr.mxu0 0.0
    %196 = vmatpush2.msra.mxu0 0.0
    %197 = vmatprep.mubr.f32.mxu0 0.0
    %198 = vmatmul.mubr.f32.gmra.mxu0 %v109
    %v199 = vpop.f32.mrf.mxu0
    %v200 = vadd.f32 %v131, %v199
    %v201 = vpop.f32.mrf.mxu0
    %202 = vdwg.mxu0
    %203 = vst.msk [vmem:[#allocation2] sm:$0xff] %vm31, %v200
    // Predicated region
    $region22: #{mlp_scalar_forward.1} parent=1 // pred_check
      _
    $region23: #{mlp_scalar_forward.1} parent=1 // pred_check_branch
      %205 = sbr.rel (0) target = $region25
    $region24: #{mlp_scalar_forward.1} parent=1 // pred_region
      %s207 = ssub.s32 128, 128
      %208 = vsyncadd [#allocation3], %s207
      %s210 = sshll.u32 [#allocation2], 4
      %s211 = int_to_ptr.vmem [resolvable:$true] %s210
      %213 = dma.vmem_to_hbm [thread:$0]  %s211, 128, %s5, [#allocation3]
    $region25: #{mlp_scalar_forward.1} parent=1 // pred_fallthru
      _
    // Predicated region
    $region26: #{mlp_scalar_forward.1} parent=1 // pred_check
      _
    $region27: #{mlp_scalar_forward.1} parent=1 // pred_check_branch
      %215 = sbr.rel (0) target = $region29
    $region28: #{mlp_scalar_forward.1} parent=1 // pred_region
      %216 = dma.done [#allocation3], 128
    $region29: #{mlp_scalar_forward.1} parent=1 // pred_fallthru
      _
    %217 = vsyncpa [#allocation3], 1

</llo_original>
